<compile_context>
chip_gen: v6e
topology: v6e:2x2x1
jax: 0.10.0
libtpu: 0.0.40
codegen_flags: <defaults>
</compile_context>

<pallas_src>
import functools

import jax
import jax.numpy as jnp
from jax.experimental import pallas as pl
from jax.experimental.pallas import tpu as pltpu


def derivnet_kernel(xT_ref, w1_ref, b1_ref, w2s_ref, b2_ref, w4s_ref, b4p_ref,
                    out_ref):
    xT = xT_ref[...]                      # (N_IN, T)   batch on lanes
    w1 = w1_ref[...]                      # (N_H1, N_IN)
    n_in, _ = xT.shape
    n_h2 = b2_ref.shape[0]

    # ---- layer 1: K = N_IN = 3 contraction as broadcast MACs on the VPU ----
    h1 = b1_ref[...] + w1[:, 0:1] * xT[0:1, :]        # (N_H1, T)
    for k in range(1, n_in):
        h1 = h1 + w1[:, k:k + 1] * xT[k:k + 1, :]
    z1 = jnp.tanh(h1)
    dz1 = 1.0 - z1 * z1                               # sech^2(h1), VALU only

    # ---- layer 2 + all 3 derivative chains: ONE matmul, K = 2*N_H1 ----
    # W2_stack already carries the per-direction w1[:,k] scaling, so the RHS is
    # just [z1; dz1] stacked along sublanes (cheap, 8-aligned blocks).
    rhs1 = jnp.concatenate([z1, dz1], axis=0)          # (2*N_H1, T)
    g = jnp.dot(w2s_ref[...], rhs1,
                preferred_element_type=jnp.float32)    # ((1+n_in)*N_H2, T)

    h2 = g[0:n_h2, :] + b2_ref[...]
    z2 = jnp.tanh(h2)
    dz2 = 1.0 - z2 * z2                                # sech^2(h2)

    # ---- layer 4 + chains: ONE matmul, K = (1+n_in)*N_H2 = 128 ----
    parts = [z2] + [dz2 * g[(k + 1) * n_h2:(k + 2) * n_h2, :]
                    for k in range(n_in)]
    rhs2 = jnp.concatenate(parts, axis=0)              # ((1+n_in)*N_H2, T)
    final = jnp.dot(w4s_ref[...], rhs2,
                    preferred_element_type=jnp.float32)  # ((1+n_in)*N_O, T)

    # b4 is zero-padded to the full slab -> the matmul result is already the
    # packed [y; dydx1; dydx2; dydx3] layout, just add the bias and store.
    out_ref[...] = final + b4p_ref[...]


@functools.partial(jax.jit, static_argnames=("tile_nx",))
def derivnet3d_2layer(x, w1, b1, w2, b2, w4, b4, *, tile_nx=1024):
    """x: (NX, N_IN); w1: (N_H1, N_IN); w2: (N_H2, N_H1); w4: (N_O, N_H2).

    Returns (y, dydx1, dydx2, dydx3), each (NX, N_O), matching the PyTorch
    DerivNet3D_2layer.forward.
    """
    nx, n_in = x.shape
    n_h1 = w1.shape[0]
    n_h2 = w2.shape[0]
    n_o = w4.shape[0]
    n_blk = 1 + n_in                      # forward + n_in derivative chains

    # ---- tile size: big (amortize grid-step overhead) but >= 2 grid steps
    # whenever NX allows it, so v7x megacore gets both TensorCores busy.
    half = pl.cdiv(nx, 2 * 128) * 128
    t = max(128, min(tile_nx, half))
    nx_pad = pl.cdiv(nx, t) * t

    # ---- pad then transpose (single small pass over the (NX, 3) input) ----
    x_pad = jnp.pad(x, ((0, nx_pad - nx), (0, 0))) if nx_pad != nx else x
    xT = x_pad.T                                               # (N_IN, nx_pad)

    # ---- batch-independent block-structured weights (folded scaling) ----
    # W2_stack: rows [h2-block; chain-1; chain-2; chain-3], cols [z1 | dz1]
    top = jnp.concatenate([w2, jnp.zeros((n_h2, n_h1), w2.dtype)], axis=1)
    rows = [top]
    for k in range(n_in):
        rows.append(jnp.concatenate(
            [jnp.zeros((n_h2, n_h1), w2.dtype), w2 * w1[:, k][None, :]],
            axis=1))
    w2s = jnp.concatenate(rows, axis=0)          # (n_blk*N_H2, 2*N_H1)

    # W4_stack = blockdiag(w4, ..., w4)
    w4s = jnp.kron(jnp.eye(n_blk, dtype=w4.dtype), w4)   # (n_blk*N_O, n_blk*N_H2)

    b1c = b1.reshape(n_h1, 1)
    b2c = b2.reshape(n_h2, 1)
    b4p = jnp.concatenate(
        [b4, jnp.zeros((n_in * n_o,), b4.dtype)]).reshape(n_blk * n_o, 1)

    n_out_rows = n_blk * n_o                                    # 32 for the demo

    out = pl.pallas_call(
        derivnet_kernel,
        out_shape=jax.ShapeDtypeStruct((n_out_rows, nx_pad), jnp.float32),
        grid=(nx_pad // t,),
        in_specs=[
            pl.BlockSpec((n_in, t), lambda i: (0, i)),           # xT: batch-tiled
            pl.BlockSpec((n_h1, n_in), lambda i: (0, 0)),        # weights/biases
            pl.BlockSpec((n_h1, 1), lambda i: (0, 0)),           #   stay resident
            pl.BlockSpec((n_blk * n_h2, 2 * n_h1), lambda i: (0, 0)),
            pl.BlockSpec((n_h2, 1), lambda i: (0, 0)),
            pl.BlockSpec((n_blk * n_o, n_blk * n_h2), lambda i: (0, 0)),
            pl.BlockSpec((n_blk * n_o, 1), lambda i: (0, 0)),
        ],
        out_specs=pl.BlockSpec((n_out_rows, t), lambda i: (0, i)),
        compiler_params=pltpu.CompilerParams(
            dimension_semantics=("parallel",)),                  # v7x: both TCs
    )(xT, w1, b1c, w2s, b2c, w4s, b4p)

    # single slice + transpose of the packed slab, then cheap lane slices
    out_t = out[:, :nx].T                                        # (NX, n_blk*N_O)
    y = out_t[:, 0:n_o]
    derivs = tuple(out_t[:, (k + 1) * n_o:(k + 2) * n_o] for k in range(n_in))
    return (y, *derivs)


def _reference(x, w1, b1, w2, b2, w4, b4):
    # pure-JAX reference mirroring the PyTorch forward exactly
    h1 = x @ w1.T + b1
    z1 = jnp.tanh(h1)
    h2 = z1 @ w2.T + b2
    z2 = jnp.tanh(h2)
    y = z2 @ w4.T + b4
    nx = x.shape[0]
    dz1dh1 = 4.0 / jnp.square(jnp.exp(-h1.T) + jnp.exp(h1.T))   # (n_h1, nx)
    dz2dh2 = 4.0 / jnp.square(jnp.exp(-h2.T) + jnp.exp(h2.T))   # (n_h2, nx)
    outs = []
    for k in range(3):
        dh1dxk = jnp.repeat(w1[:, k][:, None], nx, axis=1)      # (n_h1, nx)
        d = (w4 @ (dz2dh2 * (w2 @ (dz1dh1 * dh1dxk)))).T        # (nx, n_o)
        outs.append(d)
    return (y, *outs)


if __name__ == "__main__":
    NX, N_IN, N_H1, N_H2, N_O = 512, 3, 32, 32, 8

    key = jax.random.PRNGKey(0)
    kx, k1, kb1, k2, kb2, k4, kb4 = jax.random.split(key, 7)

    x = jax.random.normal(kx, (NX, N_IN), dtype=jnp.float32)
    # deterministic, PyTorch-Linear-like uniform init
    w1 = jax.random.uniform(k1, (N_H1, N_IN), jnp.float32, -1.0, 1.0) / jnp.sqrt(N_IN)
    b1 = jax.random.uniform(kb1, (N_H1,), jnp.float32, -1.0, 1.0) / jnp.sqrt(N_IN)
    w2 = jax.random.uniform(k2, (N_H2, N_H1), jnp.float32, -1.0, 1.0) / jnp.sqrt(N_H1)
    b2 = jax.random.uniform(kb2, (N_H2,), jnp.float32, -1.0, 1.0) / jnp.sqrt(N_H1)
    w4 = jax.random.uniform(k4, (N_O, N_H2), jnp.float32, -1.0, 1.0) / jnp.sqrt(N_H2)
    b4 = jax.random.uniform(kb4, (N_O,), jnp.float32, -1.0, 1.0) / jnp.sqrt(N_H2)

    outs = derivnet3d_2layer(x, w1, b1, w2, b2, w4, b4)   # NX=512 -> T=256, grid=(2,)
    outs = jax.block_until_ready(outs)

    refs = _reference(x, w1, b1, w2, b2, w4, b4)
    for o, r in zip(outs, refs):
        assert o.shape == r.shape, (o.shape, r.shape)
        err = float(jnp.max(jnp.abs(o - r)))
        assert jnp.allclose(o, r, atol=1e-4, rtol=1e-4), err

    print("KERNEL_OK")
</pallas_src>

<mosaic_0001>
module attributes {stable_mosaic.version = 11 : i64} {
  func.func @derivnet_kernel(%arg0: i32, %arg1: memref<3x256xf32, #tpu.memory_space<vmem>>, %arg2: memref<32x3xf32, #tpu.memory_space<vmem>>, %arg3: memref<32x1xf32, #tpu.memory_space<vmem>>, %arg4: memref<128x64xf32, #tpu.memory_space<vmem>>, %arg5: memref<32x1xf32, #tpu.memory_space<vmem>>, %arg6: memref<32x128xf32, #tpu.memory_space<vmem>>, %arg7: memref<32x1xf32, #tpu.memory_space<vmem>>, %arg8: memref<32x256xf32, #tpu.memory_space<vmem>>) attributes {dimension_semantics = [#tpu.dimension_semantics<parallel>], iteration_bounds = array<i64: 2>, scalar_prefetch = 0 : i64, scratch_operands = 0 : i64, tpu.core_type = #tpu.core_type<tc>, window_params = [{transform_indices = @transform_0, window_bounds = array<i64: 3, 256>}, {pipeline_mode = #tpu.pipeline_mode<synchronous>, transform_indices = @transform_1, window_bounds = array<i64: 32, 3>}, {pipeline_mode = #tpu.pipeline_mode<synchronous>, transform_indices = @transform_2, window_bounds = array<i64: 32, 1>}, {pipeline_mode = #tpu.pipeline_mode<synchronous>, transform_indices = @transform_3, window_bounds = array<i64: 128, 64>}, {pipeline_mode = #tpu.pipeline_mode<synchronous>, transform_indices = @transform_4, window_bounds = array<i64: 32, 1>}, {pipeline_mode = #tpu.pipeline_mode<synchronous>, transform_indices = @transform_5, window_bounds = array<i64: 32, 128>}, {pipeline_mode = #tpu.pipeline_mode<synchronous>, transform_indices = @transform_6, window_bounds = array<i64: 32, 1>}, {transform_indices = @transform_7, window_bounds = array<i64: 32, 256>}]} {
    %c0 = arith.constant 0 : index
    %c0_0 = arith.constant 0 : index
    %0 = vector.load %arg1[%c0, %c0_0] : memref<3x256xf32, #tpu.memory_space<vmem>>, vector<3x256xf32>
    %c0_1 = arith.constant 0 : index
    %c0_2 = arith.constant 0 : index
    %1 = vector.load %arg2[%c0_1, %c0_2] : memref<32x3xf32, #tpu.memory_space<vmem>>, vector<32x3xf32>
    %c0_3 = arith.constant 0 : index
    %c0_4 = arith.constant 0 : index
    %2 = vector.load %arg3[%c0_3, %c0_4] : memref<32x1xf32, #tpu.memory_space<vmem>>, vector<32x1xf32>
    %3 = vector.extract_strided_slice %1 {offsets = [0, 0], sizes = [32, 1], strides = [1, 1]} : vector<32x3xf32> to vector<32x1xf32>
    %4 = vector.extract_strided_slice %0 {offsets = [0, 0], sizes = [1, 256], strides = [1, 1]} : vector<3x256xf32> to vector<1x256xf32>
    %5 = vector.broadcast %3 : vector<32x1xf32> to vector<32x256xf32>
    %6 = vector.broadcast %4 : vector<1x256xf32> to vector<32x256xf32>
    %7 = arith.mulf %5, %6 : vector<32x256xf32>
    %8 = vector.broadcast %2 : vector<32x1xf32> to vector<32x256xf32>
    %9 = arith.addf %8, %7 : vector<32x256xf32>
    %10 = vector.extract_strided_slice %1 {offsets = [0, 1], sizes = [32, 1], strides = [1, 1]} : vector<32x3xf32> to vector<32x1xf32>
    %11 = vector.extract_strided_slice %0 {offsets = [1, 0], sizes = [1, 256], strides = [1, 1]} : vector<3x256xf32> to vector<1x256xf32>
    %12 = vector.broadcast %10 : vector<32x1xf32> to vector<32x256xf32>
    %13 = vector.broadcast %11 : vector<1x256xf32> to vector<32x256xf32>
    %14 = arith.mulf %12, %13 : vector<32x256xf32>
    %15 = arith.addf %9, %14 : vector<32x256xf32>
    %16 = vector.extract_strided_slice %1 {offsets = [0, 2], sizes = [32, 1], strides = [1, 1]} : vector<32x3xf32> to vector<32x1xf32>
    %17 = vector.extract_strided_slice %0 {offsets = [2, 0], sizes = [1, 256], strides = [1, 1]} : vector<3x256xf32> to vector<1x256xf32>
    %18 = vector.broadcast %16 : vector<32x1xf32> to vector<32x256xf32>
    %19 = vector.broadcast %17 : vector<1x256xf32> to vector<32x256xf32>
    %20 = arith.mulf %18, %19 : vector<32x256xf32>
    %21 = arith.addf %15, %20 : vector<32x256xf32>
    %22 = math.tanh %21 : vector<32x256xf32>
    %23 = arith.mulf %22, %22 : vector<32x256xf32>
    %cst = arith.constant 1.000000e+00 : f32
    %24 = vector.broadcast %cst : f32 to vector<32x256xf32>
    %25 = arith.subf %24, %23 : vector<32x256xf32>
    %26 = tpu.concatenate %22, %25 in 0 : vector<32x256xf32>, vector<32x256xf32> -> vector<64x256xf32>
    %c0_5 = arith.constant 0 : index
    %c0_6 = arith.constant 0 : index
    %27 = vector.load %arg4[%c0_5, %c0_6] : memref<128x64xf32, #tpu.memory_space<vmem>>, vector<128x64xf32>
    %cst_7 = arith.constant dense<0.000000e+00> : vector<128x256xf32>
    %28 = tpu.matmul %27, %26, %cst_7 {dimension_numbers = #tpu.dot_dimension_numbers<[1], [0], [0], [1], [0, 0, 1, 1], [], []>} : vector<128x64xf32>, vector<64x256xf32>, vector<128x256xf32> -> vector<128x256xf32>
    %29 = vector.extract_strided_slice %28 {offsets = [0, 0], sizes = [32, 256], strides = [1, 1]} : vector<128x256xf32> to vector<32x256xf32>
    %c0_8 = arith.constant 0 : index
    %c0_9 = arith.constant 0 : index
    %30 = vector.load %arg5[%c0_8, %c0_9] : memref<32x1xf32, #tpu.memory_space<vmem>>, vector<32x1xf32>
    %31 = vector.broadcast %30 : vector<32x1xf32> to vector<32x256xf32>
    %32 = arith.addf %29, %31 : vector<32x256xf32>
    %33 = math.tanh %32 : vector<32x256xf32>
    %34 = arith.mulf %33, %33 : vector<32x256xf32>
    %cst_10 = arith.constant 1.000000e+00 : f32
    %35 = vector.broadcast %cst_10 : f32 to vector<32x256xf32>
    %36 = arith.subf %35, %34 : vector<32x256xf32>
    %37 = vector.extract_strided_slice %28 {offsets = [32, 0], sizes = [32, 256], strides = [1, 1]} : vector<128x256xf32> to vector<32x256xf32>
    %38 = arith.mulf %36, %37 : vector<32x256xf32>
    %39 = vector.extract_strided_slice %28 {offsets = [64, 0], sizes = [32, 256], strides = [1, 1]} : vector<128x256xf32> to vector<32x256xf32>
    %40 = arith.mulf %36, %39 : vector<32x256xf32>
    %41 = vector.extract_strided_slice %28 {offsets = [96, 0], sizes = [32, 256], strides = [1, 1]} : vector<128x256xf32> to vector<32x256xf32>
    %42 = arith.mulf %36, %41 : vector<32x256xf32>
    %43 = tpu.concatenate %33, %38, %40, %42 in 0 : vector<32x256xf32>, vector<32x256xf32>, vector<32x256xf32>, vector<32x256xf32> -> vector<128x256xf32>
    %c0_11 = arith.constant 0 : index
    %c0_12 = arith.constant 0 : index
    %44 = vector.load %arg6[%c0_11, %c0_12] : memref<32x128xf32, #tpu.memory_space<vmem>>, vector<32x128xf32>
    %cst_13 = arith.constant dense<0.000000e+00> : vector<32x256xf32>
    %45 = tpu.matmul %44, %43, %cst_13 {dimension_numbers = #tpu.dot_dimension_numbers<[1], [0], [0], [1], [0, 0, 1, 1], [], []>} : vector<32x128xf32>, vector<128x256xf32>, vector<32x256xf32> -> vector<32x256xf32>
    %c0_14 = arith.constant 0 : index
    %c0_15 = arith.constant 0 : index
    %46 = vector.load %arg7[%c0_14, %c0_15] : memref<32x1xf32, #tpu.memory_space<vmem>>, vector<32x1xf32>
    %47 = vector.broadcast %46 : vector<32x1xf32> to vector<32x256xf32>
    %48 = arith.addf %45, %47 : vector<32x256xf32>
    %c0_16 = arith.constant 0 : index
    %c0_17 = arith.constant 0 : index
    %49 = vector.load %arg8[%c0_16, %c0_17] : memref<32x256xf32, #tpu.memory_space<vmem>>, vector<32x256xf32>
    tpu.vector_store %arg8[%c0_16, %c0_17], %48 {strides = array<i32>} : memref<32x256xf32, #tpu.memory_space<vmem>>, vector<32x256xf32>,
    return
  }
  func.func @transform_0(%arg0: i32) -> (i32, i32) {
    %c0_i32 = arith.constant 0 : i32
    %c0_i32_0 = arith.constant 0 : i32
    return %c0_i32, %arg0 : i32, i32
  }
  func.func @transform_1(%arg0: i32) -> (i32, i32) {
    %c0_i32 = arith.constant 0 : i32
    %c0_i32_0 = arith.constant 0 : i32
    %c0_i32_1 = arith.constant 0 : i32
    return %c0_i32, %c0_i32_0 : i32, i32
  }
  func.func @transform_2(%arg0: i32) -> (i32, i32) {
    %c0_i32 = arith.constant 0 : i32
    %c0_i32_0 = arith.constant 0 : i32
    %c0_i32_1 = arith.constant 0 : i32
    return %c0_i32, %c0_i32_0 : i32, i32
  }
  func.func @transform_3(%arg0: i32) -> (i32, i32) {
    %c0_i32 = arith.constant 0 : i32
    %c0_i32_0 = arith.constant 0 : i32
    %c0_i32_1 = arith.constant 0 : i32
    return %c0_i32, %c0_i32_0 : i32, i32
  }
  func.func @transform_4(%arg0: i32) -> (i32, i32) {
    %c0_i32 = arith.constant 0 : i32
    %c0_i32_0 = arith.constant 0 : i32
    %c0_i32_1 = arith.constant 0 : i32
    return %c0_i32, %c0_i32_0 : i32, i32
  }
  func.func @transform_5(%arg0: i32) -> (i32, i32) {
    %c0_i32 = arith.constant 0 : i32
    %c0_i32_0 = arith.constant 0 : i32
    %c0_i32_1 = arith.constant 0 : i32
    return %c0_i32, %c0_i32_0 : i32, i32
  }
  func.func @transform_6(%arg0: i32) -> (i32, i32) {
    %c0_i32 = arith.constant 0 : i32
    %c0_i32_0 = arith.constant 0 : i32
    %c0_i32_1 = arith.constant 0 : i32
    return %c0_i32, %c0_i32_0 : i32, i32
  }
  func.func @transform_7(%arg0: i32) -> (i32, i32) {
    %c0_i32 = arith.constant 0 : i32
    %c0_i32_0 = arith.constant 0 : i32
    return %c0_i32, %arg0 : i32, i32
  }
}

</mosaic_0001>

<llo_original>
// kernel: derivnet3d_2layer.1
$region0: #{derivnet3d_2layer.1}
  #allocation0 [shape = 'u32[]', space=smem, size = 0x4, offset = 0x4, fixed_abs, tag = 'smem constant byte address 0x4 - core index']
  #allocation1 [shape = 'u32[144,128]{1,0:T(1,128)}', space=vmem, size = 0x12000, scoped, tag = 'internal scratch']
  %s0 = inlined_call_operand.vmem [shape: f32[3,512], index: 0, kind: input, shape index: {}]
  %s1 = inlined_call_operand.vmem [shape: f32[32,3], index: 1, kind: input, shape index: {}]
  %s2 = inlined_call_operand.vmem [shape: f32[32,1], index: 2, kind: input, shape index: {}]
  %s3 = inlined_call_operand.vmem [shape: f32[128,64], index: 3, kind: input, shape index: {}]
  %s4 = inlined_call_operand.vmem [shape: f32[32,1], index: 4, kind: input, shape index: {}]
  %s5 = inlined_call_operand.vmem [shape: f32[32,128], index: 5, kind: input, shape index: {}]
  %s6 = inlined_call_operand.vmem [shape: f32[32,1], index: 6, kind: input, shape index: {}]
  %s7 = inlined_call_operand.vmem [shape: f32[32,512], index: 7, kind: output, shape index: {}]
  %s8 = sld [smem:[#allocation0]]
  $region80: #{derivnet3d_2layer.1} parent=0
    _
  %s10 = ssub.s32 1, %s8
  %s11 = scalar_select 0, %s10, %s8
  $region1: #{derivnet3d_2layer.1} parent=0
    #allocation2 [shape = 'u8[65536]{0}', space=vmem, size = 0x10000, scoped, tag = 'output window, operand 0']
    loop: start=0, step=1, limit=4
    $region2: #{derivnet3d_2layer.1} parent=1 // loop_pre_header
      _
    $region3: #{derivnet3d_2layer.1} parent=1 // loop_header
      %s13 = sphi 0, %s17
      %p14 = scmp.ge.s32.totalorder %s13, 4
      %s23 = sphi 0, %s25
      %s26 = sphi 0, %s23
      %s27 = sphi 0, %s26
      %s43 = sphi 0, %s27
      %s47 = sphi 0, %s47
      %s49 = sphi 0, %s47
      %s50 = sphi 0, %s49
      %s64 = sphi 0, %s50
      %s68 = sphi 0, %s68
      %s70 = sphi 0, %s68
      %s71 = sphi 0, %s70
      %s85 = sphi 0, %s71
      %s89 = sphi 0, %s89
      %s91 = sphi 0, %s89
      %s92 = sphi 0, %s91
      %s106 = sphi 0, %s92
      %s110 = sphi 0, %s110
      %s112 = sphi 0, %s110
      %s113 = sphi 0, %s112
      %s127 = sphi 0, %s113
      %s131 = sphi 0, %s131
      %s133 = sphi 0, %s131
      %s134 = sphi 0, %s133
      %s148 = sphi 0, %s134
      %s152 = sphi 0, %s152
      %s154 = sphi 0, %s152
      %s155 = sphi 0, %s154
      %s169 = sphi 0, %s155
      %s175 = sphi 0, %s177
      %s178 = sphi 0, %s175
      %s179 = sphi 0, %s178
      %s195 = sphi 0, %s179
    $region4: #{derivnet3d_2layer.1} parent=1 // loop_header_branch
      %16 = sbr.rel (%p14) target = $region8
    $region5: #{derivnet3d_2layer.1} parent=1 // loop_body
      %s18 = ssub.s32 %s13, 1
      %s19 = ssub.s32 %s13, 2
      %s20 = sadd.s32 %s13, 1
      %s21 = ssub.s32 %s13, %s20
      %p22 = scmp.eq.s32.totalorder %s21, 0
      %s24 = sadd.s32 %s23, 1
      %s25 = scalar_select %p22, %s23, %s24
      %p28 = pneg %p22
      %p29 = scmp.eq.s32.totalorder %s13, 1
      %p30 = por %p28, %p29
      %p31 = scmp.ne.s32.totalorder %s23, %s26
      %p32 = scmp.eq.s32.totalorder %s13, 0
      %p33 = por %p31, %p32
      %p34 = scmp.ne.s32.totalorder %s23, %s26
      %p35 = scmp.eq.s32.totalorder %s18, 1
      %p36 = por %p34, %p35
      %p37 = scmp.ne.s32.totalorder %s26, %s27
      %p38 = scmp.eq.s32.totalorder %s18, 0
      %p39 = por %p37, %p38
      %p40 = scmp.ne.s32.totalorder %s26, %s27
      %p41 = scmp.eq.s32.totalorder %s19, 1
      %p42 = por %p40, %p41
      %p44 = scmp.ne.s32.totalorder %s27, %s43
      %p45 = scmp.eq.s32.totalorder %s19, 0
      %p46 = por %p44, %p45
      %s48 = sadd.s32 %s47, 1
      %p51 = scmp.eq.s32.totalorder %s13, 1
      %p52 = scmp.ne.s32.totalorder %s47, %s49
      %p53 = scmp.eq.s32.totalorder %s13, 0
      %p54 = por %p52, %p53
      %p55 = scmp.ne.s32.totalorder %s47, %s49
      %p56 = scmp.eq.s32.totalorder %s18, 1
      %p57 = por %p55, %p56
      %p58 = scmp.ne.s32.totalorder %s49, %s50
      %p59 = scmp.eq.s32.totalorder %s18, 0
      %p60 = por %p58, %p59
      %p61 = scmp.ne.s32.totalorder %s49, %s50
      %p62 = scmp.eq.s32.totalorder %s19, 1
      %p63 = por %p61, %p62
      %p65 = scmp.ne.s32.totalorder %s50, %s64
      %p66 = scmp.eq.s32.totalorder %s19, 0
      %p67 = por %p65, %p66
      %s69 = sadd.s32 %s68, 1
      %p72 = scmp.eq.s32.totalorder %s13, 1
      %p73 = scmp.ne.s32.totalorder %s68, %s70
      %p74 = scmp.eq.s32.totalorder %s13, 0
      %p75 = por %p73, %p74
      %p76 = scmp.ne.s32.totalorder %s68, %s70
      %p77 = scmp.eq.s32.totalorder %s18, 1
      %p78 = por %p76, %p77
      %p79 = scmp.ne.s32.totalorder %s70, %s71
      %p80 = scmp.eq.s32.totalorder %s18, 0
      %p81 = por %p79, %p80
      %p82 = scmp.ne.s32.totalorder %s70, %s71
      %p83 = scmp.eq.s32.totalorder %s19, 1
      %p84 = por %p82, %p83
      %p86 = scmp.ne.s32.totalorder %s71, %s85
      %p87 = scmp.eq.s32.totalorder %s19, 0
      %p88 = por %p86, %p87
      %s90 = sadd.s32 %s89, 1
      %p93 = scmp.eq.s32.totalorder %s13, 1
      %p94 = scmp.ne.s32.totalorder %s89, %s91
      %p95 = scmp.eq.s32.totalorder %s13, 0
      %p96 = por %p94, %p95
      %p97 = scmp.ne.s32.totalorder %s89, %s91
      %p98 = scmp.eq.s32.totalorder %s18, 1
      %p99 = por %p97, %p98
      %p100 = scmp.ne.s32.totalorder %s91, %s92
      %p101 = scmp.eq.s32.totalorder %s18, 0
      %p102 = por %p100, %p101
      %p103 = scmp.ne.s32.totalorder %s91, %s92
      %p104 = scmp.eq.s32.totalorder %s19, 1
      %p105 = por %p103, %p104
      %p107 = scmp.ne.s32.totalorder %s92, %s106
      %p108 = scmp.eq.s32.totalorder %s19, 0
      %p109 = por %p107, %p108
      %s111 = sadd.s32 %s110, 1
      %p114 = scmp.eq.s32.totalorder %s13, 1
      %p115 = scmp.ne.s32.totalorder %s110, %s112
      %p116 = scmp.eq.s32.totalorder %s13, 0
      %p117 = por %p115, %p116
      %p118 = scmp.ne.s32.totalorder %s110, %s112
      %p119 = scmp.eq.s32.totalorder %s18, 1
      %p120 = por %p118, %p119
      %p121 = scmp.ne.s32.totalorder %s112, %s113
      %p122 = scmp.eq.s32.totalorder %s18, 0
      %p123 = por %p121, %p122
      %p124 = scmp.ne.s32.totalorder %s112, %s113
      %p125 = scmp.eq.s32.totalorder %s19, 1
      %p126 = por %p124, %p125
      %p128 = scmp.ne.s32.totalorder %s113, %s127
      %p129 = scmp.eq.s32.totalorder %s19, 0
      %p130 = por %p128, %p129
      %s132 = sadd.s32 %s131, 1
      %p135 = scmp.eq.s32.totalorder %s13, 1
      %p136 = scmp.ne.s32.totalorder %s131, %s133
      %p137 = scmp.eq.s32.totalorder %s13, 0
      %p138 = por %p136, %p137
      %p139 = scmp.ne.s32.totalorder %s131, %s133
      %p140 = scmp.eq.s32.totalorder %s18, 1
      %p141 = por %p139, %p140
      %p142 = scmp.ne.s32.totalorder %s133, %s134
      %p143 = scmp.eq.s32.totalorder %s18, 0
      %p144 = por %p142, %p143
      %p145 = scmp.ne.s32.totalorder %s133, %s134
      %p146 = scmp.eq.s32.totalorder %s19, 1
      %p147 = por %p145, %p146
      %p149 = scmp.ne.s32.totalorder %s134, %s148
      %p150 = scmp.eq.s32.totalorder %s19, 0
      %p151 = por %p149, %p150
      %s153 = sadd.s32 %s152, 1
      %p156 = scmp.eq.s32.totalorder %s13, 1
      %p157 = scmp.ne.s32.totalorder %s152, %s154
      %p158 = scmp.eq.s32.totalorder %s13, 0
      %p159 = por %p157, %p158
      %p160 = scmp.ne.s32.totalorder %s152, %s154
      %p161 = scmp.eq.s32.totalorder %s18, 1
      %p162 = por %p160, %p161
      %p163 = scmp.ne.s32.totalorder %s154, %s155
      %p164 = scmp.eq.s32.totalorder %s18, 0
      %p165 = por %p163, %p164
      %p166 = scmp.ne.s32.totalorder %s154, %s155
      %p167 = scmp.eq.s32.totalorder %s19, 1
      %p168 = por %p166, %p167
      %p170 = scmp.ne.s32.totalorder %s155, %s169
      %p171 = scmp.eq.s32.totalorder %s19, 0
      %p172 = por %p170, %p171
      %s173 = ssub.s32 %s13, %s20
      %p174 = scmp.eq.s32.totalorder %s173, 0
      %s176 = sadd.s32 %s175, 1
      %s177 = scalar_select %p174, %s175, %s176
      %p180 = pneg %p174
      %p181 = scmp.eq.s32.totalorder %s13, 1
      %p182 = por %p180, %p181
      %p183 = scmp.ne.s32.totalorder %s175, %s178
      %p184 = scmp.eq.s32.totalorder %s13, 0
      %p185 = por %p183, %p184
      %p186 = scmp.ne.s32.totalorder %s175, %s178
      %p187 = scmp.eq.s32.totalorder %s18, 1
      %p188 = por %p186, %p187
      %p189 = scmp.ne.s32.totalorder %s178, %s179
      %p190 = scmp.eq.s32.totalorder %s18, 0
      %p191 = por %p189, %p190
      %p192 = scmp.ne.s32.totalorder %s178, %s179
      %p193 = scmp.eq.s32.totalorder %s19, 1
      %p194 = por %p192, %p193
      %p196 = scmp.ne.s32.totalorder %s179, %s195
      %p197 = scmp.eq.s32.totalorder %s19, 0
      %p198 = por %p196, %p197
      %p199 = scmp.le.s32.totalorder 1, %s13
      %p200 = scmp.lt.s32.totalorder %s13, 3
      %p201 = pnand %p199, %p200
      %p202 = pneg %p201
      // Predicated region
      $region9: #{derivnet3d_2layer.1} parent=5 // pred_check
        _
      $region10: #{derivnet3d_2layer.1} parent=5 // pred_check_branch
        %204 = sbr.rel (%p201) target = $region12
      $region11: #{derivnet3d_2layer.1} parent=5 // pred_region
        %s205 = ssub.s32 %s13, 1
        // Predicated region
        $region13: #{derivnet3d_2layer.1} parent=11 // pred_check
          %p206 = pneg %p60
        $region14: #{derivnet3d_2layer.1} parent=11 // pred_check_branch
          %208 = sbr.rel (%p206) target = $region16
        $region15: #{derivnet3d_2layer.1} parent=11 // pred_region
          _
        $region16: #{derivnet3d_2layer.1} parent=11 // pred_fallthru
          _
        // Predicated region
        $region17: #{derivnet3d_2layer.1} parent=11 // pred_check
          %p209 = pneg %p81
        $region18: #{derivnet3d_2layer.1} parent=11 // pred_check_branch
          %211 = sbr.rel (%p209) target = $region20
        $region19: #{derivnet3d_2layer.1} parent=11 // pred_region
          _
        $region20: #{derivnet3d_2layer.1} parent=11 // pred_fallthru
          _
        // Predicated region
        $region21: #{derivnet3d_2layer.1} parent=11 // pred_check
          %p212 = pneg %p102
        $region22: #{derivnet3d_2layer.1} parent=11 // pred_check_branch
          %214 = sbr.rel (%p212) target = $region24
        $region23: #{derivnet3d_2layer.1} parent=11 // pred_region
          _
        $region24: #{derivnet3d_2layer.1} parent=11 // pred_fallthru
          _
        // Predicated region
        $region25: #{derivnet3d_2layer.1} parent=11 // pred_check
          %p215 = pneg %p123
        $region26: #{derivnet3d_2layer.1} parent=11 // pred_check_branch
          %217 = sbr.rel (%p215) target = $region28
        $region27: #{derivnet3d_2layer.1} parent=11 // pred_region
          _
        $region28: #{derivnet3d_2layer.1} parent=11 // pred_fallthru
          _
        // Predicated region
        $region29: #{derivnet3d_2layer.1} parent=11 // pred_check
          %p218 = pneg %p144
        $region30: #{derivnet3d_2layer.1} parent=11 // pred_check_branch
          %220 = sbr.rel (%p218) target = $region32
        $region31: #{derivnet3d_2layer.1} parent=11 // pred_region
          _
        $region32: #{derivnet3d_2layer.1} parent=11 // pred_fallthru
          _
        // Predicated region
        $region33: #{derivnet3d_2layer.1} parent=11 // pred_check
          %p221 = pneg %p165
        $region34: #{derivnet3d_2layer.1} parent=11 // pred_check_branch
          %223 = sbr.rel (%p221) target = $region36
        $region35: #{derivnet3d_2layer.1} parent=11 // pred_region
          _
        $region36: #{derivnet3d_2layer.1} parent=11 // pred_fallthru
          _
      $region12: #{derivnet3d_2layer.1} parent=5 // pred_fallthru
        _
      %p224 = scmp.lt.s32.totalorder %s13, 2
      // Predicated region
      $region37: #{derivnet3d_2layer.1} parent=5 // pred_check
        %p225 = pneg %p224
      $region38: #{derivnet3d_2layer.1} parent=5 // pred_check_branch
        %227 = sbr.rel (%p225) target = $region40
      $region39: #{derivnet3d_2layer.1} parent=5 // pred_region
        // Predicated region
        $region41: #{derivnet3d_2layer.1} parent=39 // pred_check
          %p228 = pneg %p33
        $region42: #{derivnet3d_2layer.1} parent=39 // pred_check_branch
          %230 = sbr.rel (%p228) target = $region44
        $region43: #{derivnet3d_2layer.1} parent=39 // pred_region
          %s231 = smul.u32 2, %s13
          %p232 = scmp.lt.s32.totalorder %s231, 3
          %s233 = scalar_select %p232, %s231, 3
          %s234 = smul.addr %s233, 4
          %s235 = scalar_lea.vmem %s0, %s234
          %s236 = smul.u32 2, %s13
        $region44: #{derivnet3d_2layer.1} parent=39 // pred_fallthru
          _
      $region40: #{derivnet3d_2layer.1} parent=5 // pred_fallthru
        _
      %p237 = scmp.le.s32.totalorder 1, %s13
      %p238 = scmp.lt.s32.totalorder %s13, 3
      %p239 = pnand %p237, %p238
      %p240 = pneg %p239
      // Predicated region
      $region45: #{derivnet3d_2layer.1} parent=5 // pred_check
        _
      $region46: #{derivnet3d_2layer.1} parent=5 // pred_check_branch
        %242 = sbr.rel (%p239) target = $region48
      $region47: #{derivnet3d_2layer.1} parent=5 // pred_region
        %s243 = ssub.s32 %s13, 1
        %s244 = smul.u32 2, %s18
        %p245 = scmp.lt.s32.totalorder %s244, 3
        %s246 = scalar_select %p245, %s244, 3
        %s247 = smul.addr %s246, 4
        %s248 = scalar_lea.vmem %s0, %s247
        %p249 = pneg %p39
        %p250 = pneg %p36
        %p251 = pneg %p60
        %p252 = pneg %p57
        %p253 = pneg %p81
        %p254 = pneg %p78
        %p255 = pneg %p102
        %p256 = pneg %p99
        %p257 = pneg %p123
        %p258 = pneg %p120
        %p259 = pneg %p144
        %p260 = pneg %p141
        %p261 = pneg %p165
        %p262 = pneg %p162
        %p263 = pneg %p191
        %p264 = pneg %p188
        %s265 = sand.u32 %s178, 1
        %s266 = sand.u32 %s178, 1
        %s267 = smul.addr %s266, 64
        %s268 = scalar_lea.vmem [#allocation2], %s267
        %s269 = smul.u32 2, %s18
        %p270 = scmp.lt.s32.totalorder %s269, 3
        %s271 = scalar_select %p270, %s269, 3
        %s272 = smul.addr %s271, 4
        %s273 = scalar_lea.vmem %s0, %s272
        %s274 = smul.u32 2, %s18
        %s275 = smul.u32 2, %s18
        %v276 = vld [vmem:[%s273] sm:$0x77]
        %v277 = vld [vmem:[%s1] sm:$0xff]
        %v278 = vld [vmem:[%s1 + $0x8] sm:$0xff]
        %v279 = vld [vmem:[%s1 + $0x10] sm:$0xff]
        %v280 = vld [vmem:[%s1 + $0x18] sm:$0xff]
        %v281 = vld [vmem:[%s2] sm:$0xff]
        %v282 = vld [vmem:[%s2 + $0x8] sm:$0xff]
        %v283 = vld [vmem:[%s2 + $0x10] sm:$0xff]
        %v284 = vld [vmem:[%s2 + $0x18] sm:$0xff]
        %286 = vset.pattern.permute.xlu0 0
        %287 = vperm.xlu0 %286, %v277
        %v288 = vpop.permute.xlu0 %287
        %291 = vset.pattern.permute.xlu0 0
        %292 = vperm.xlu0 %291, %v278
        %v293 = vpop.permute.xlu0 %292
        %296 = vset.pattern.permute.xlu0 0
        %297 = vperm.xlu0 %296, %v279
        %v298 = vpop.permute.xlu0 %297
        %301 = vset.pattern.permute.xlu0 0
        %302 = vperm.xlu0 %301, %v280
        %v303 = vpop.permute.xlu0 %302
        %v306 = vlaneseq
        %v307 = vshrl.u32 %v306, 7
        %v308 = vsub.s32 0, %v307
        %v309 = vrot.slane %v276, %v308
        %v310 = vlaneseq
        %v311 = vshrl.u32 %v310, 7
        %v312 = vsub.s32 4, %v311
        %v313 = vrot.slane %v276, %v312
        %v316 = vlaneseq
        %v317 = vshrl.u32 %v316, 7
        %v318 = vsub.s32 0, %v317
        %v319 = vrot.slane %v309, %v318
        %v320 = vlaneseq
        %v321 = vshrl.u32 %v320, 7
        %v322 = vsub.s32 0, %v321
        %v323 = vrot.slane %v313, %v322
        %v324 = vmul.f32 %v288, %v319
        %v325 = vmul.f32 %v288, %v323
        %v326 = vmul.f32 %v293, %v319
        %v327 = vmul.f32 %v293, %v323
        %v328 = vmul.f32 %v298, %v319
        %v329 = vmul.f32 %v298, %v323
        %v330 = vmul.f32 %v303, %v319
        %v331 = vmul.f32 %v303, %v323
        %333 = vset.pattern.permute.xlu0 0
        %334 = vperm.xlu0 %333, %v281
        %v335 = vpop.permute.xlu0 %334
        %338 = vset.pattern.permute.xlu0 0
        %339 = vperm.xlu0 %338, %v282
        %v340 = vpop.permute.xlu0 %339
        %343 = vset.pattern.permute.xlu0 0
        %344 = vperm.xlu0 %343, %v283
        %v345 = vpop.permute.xlu0 %344
        %348 = vset.pattern.permute.xlu0 0
        %349 = vperm.xlu0 %348, %v284
        %v350 = vpop.permute.xlu0 %349
        %v352 = vadd.f32 %v335, %v324
        %v353 = vadd.f32 %v335, %v325
        %v354 = vadd.f32 %v340, %v326
        %v355 = vadd.f32 %v340, %v327
        %v356 = vadd.f32 %v345, %v328
        %v357 = vadd.f32 %v345, %v329
        %v358 = vadd.f32 %v350, %v330
        %v359 = vadd.f32 %v350, %v331
        %360 = vset.pattern.permute.xlu0 1
        %361 = vperm.xlu0 %360, %v277
        %v362 = vpop.permute.xlu0 %361
        %364 = vset.pattern.permute.xlu0 1
        %365 = vperm.xlu0 %364, %v278
        %v366 = vpop.permute.xlu0 %365
        %368 = vset.pattern.permute.xlu0 1
        %369 = vperm.xlu0 %368, %v279
        %v370 = vpop.permute.xlu0 %369
        %372 = vset.pattern.permute.xlu0 1
        %373 = vperm.xlu0 %372, %v280
        %v374 = vpop.permute.xlu0 %373
        %v376 = vlaneseq
        %v377 = vshrl.u32 %v376, 7
        %v378 = vsub.s32 1, %v377
        %v379 = vrot.slane %v276, %v378
        %v380 = vlaneseq
        %v381 = vshrl.u32 %v380, 7
        %v382 = vsub.s32 5, %v381
        %v383 = vrot.slane %v276, %v382
        %v386 = vlaneseq
        %v387 = vshrl.u32 %v386, 7
        %v388 = vsub.s32 1, %v387
        %v389 = vrot.slane %v379, %v388
        %v390 = vlaneseq
        %v391 = vshrl.u32 %v390, 7
        %v392 = vsub.s32 1, %v391
        %v393 = vrot.slane %v383, %v392
        %v394 = vmul.f32 %v362, %v389
        %v395 = vmul.f32 %v362, %v393
        %v396 = vmul.f32 %v366, %v389
        %v397 = vmul.f32 %v366, %v393
        %v398 = vmul.f32 %v370, %v389
        %v399 = vmul.f32 %v370, %v393
        %v400 = vmul.f32 %v374, %v389
        %v401 = vmul.f32 %v374, %v393
        %v402 = vadd.f32 %v352, %v394
        %v403 = vadd.f32 %v353, %v395
        %v404 = vadd.f32 %v354, %v396
        %v405 = vadd.f32 %v355, %v397
        %v406 = vadd.f32 %v356, %v398
        %v407 = vadd.f32 %v357, %v399
        %v408 = vadd.f32 %v358, %v400
        %v409 = vadd.f32 %v359, %v401
        %410 = vset.pattern.permute.xlu0 2
        %411 = vperm.xlu0 %410, %v277
        %v412 = vpop.permute.xlu0 %411
        %414 = vset.pattern.permute.xlu0 2
        %415 = vperm.xlu0 %414, %v278
        %v416 = vpop.permute.xlu0 %415
        %418 = vset.pattern.permute.xlu0 2
        %419 = vperm.xlu0 %418, %v279
        %v420 = vpop.permute.xlu0 %419
        %422 = vset.pattern.permute.xlu0 2
        %423 = vperm.xlu0 %422, %v280
        %v424 = vpop.permute.xlu0 %423
        %v426 = vlaneseq
        %v427 = vshrl.u32 %v426, 7
        %v428 = vsub.s32 2, %v427
        %v429 = vrot.slane %v276, %v428
        %v430 = vlaneseq
        %v431 = vshrl.u32 %v430, 7
        %v432 = vsub.s32 6, %v431
        %v433 = vrot.slane %v276, %v432
        %v436 = vlaneseq
        %v437 = vshrl.u32 %v436, 7
        %v438 = vsub.s32 2, %v437
        %v439 = vrot.slane %v429, %v438
        %v440 = vlaneseq
        %v441 = vshrl.u32 %v440, 7
        %v442 = vsub.s32 2, %v441
        %v443 = vrot.slane %v433, %v442
        %v444 = vmul.f32 %v412, %v439
        %v445 = vmul.f32 %v412, %v443
        %v446 = vmul.f32 %v416, %v439
        %v447 = vmul.f32 %v416, %v443
        %v448 = vmul.f32 %v420, %v439
        %v449 = vmul.f32 %v420, %v443
        %v450 = vmul.f32 %v424, %v439
        %v451 = vmul.f32 %v424, %v443
        %v452 = vadd.f32 %v402, %v444
        %v453 = vadd.f32 %v403, %v445
        %v454 = vadd.f32 %v404, %v446
        %v455 = vadd.f32 %v405, %v447
        %v456 = vadd.f32 %v406, %v448
        %v457 = vadd.f32 %v407, %v449
        %v458 = vadd.f32 %v408, %v450
        %v459 = vadd.f32 %v409, %v451
        %v460 = vtanh.pop %v452
        %v461 = vtanh.pop %v453
        %v462 = vtanh.pop %v454
        %v463 = vtanh.pop %v455
        %v464 = vtanh.pop %v456
        %v465 = vtanh.pop %v457
        %v466 = vtanh.pop %v458
        %v467 = vtanh.pop %v459
        %v468 = vmul.f32 %v460, %v460
        %v469 = vmul.f32 %v461, %v461
        %v470 = vmul.f32 %v462, %v462
        %v471 = vmul.f32 %v463, %v463
        %v472 = vmul.f32 %v464, %v464
        %v473 = vmul.f32 %v465, %v465
        %v474 = vmul.f32 %v466, %v466
        %v475 = vmul.f32 %v467, %v467
        %v476 = vsub.f32 1.0, %v468
        %v477 = vsub.f32 1.0, %v469
        %v478 = vsub.f32 1.0, %v470
        %v479 = vsub.f32 1.0, %v471
        %v480 = vsub.f32 1.0, %v472
        %v481 = vsub.f32 1.0, %v473
        %v482 = vsub.f32 1.0, %v474
        %v483 = vsub.f32 1.0, %v475
        %v484 = vld [vmem:[%s3] sm:$0xff]
        %v485 = vld [vmem:[%s3 + $0x8] sm:$0xff]
        %v486 = vld [vmem:[%s3 + $0x10] sm:$0xff]
        %v487 = vld [vmem:[%s3 + $0x18] sm:$0xff]
        %v488 = vld [vmem:[%s3 + $0x20] sm:$0xff]
        %v489 = vld [vmem:[%s3 + $0x28] sm:$0xff]
        %v490 = vld [vmem:[%s3 + $0x30] sm:$0xff]
        %v491 = vld [vmem:[%s3 + $0x38] sm:$0xff]
        %v492 = vld [vmem:[%s3 + $0x40] sm:$0xff]
        %v493 = vld [vmem:[%s3 + $0x48] sm:$0xff]
        %v494 = vld [vmem:[%s3 + $0x50] sm:$0xff]
        %v495 = vld [vmem:[%s3 + $0x58] sm:$0xff]
        %v496 = vld [vmem:[%s3 + $0x60] sm:$0xff]
        %v497 = vld [vmem:[%s3 + $0x68] sm:$0xff]
        %v498 = vld [vmem:[%s3 + $0x70] sm:$0xff]
        %v499 = vld [vmem:[%s3 + $0x78] sm:$0xff]
        %vm500 = vcmask 523264
        %v502 = vsel %vm500, %v484, 0
        %v505 = vsel %vm500, %v485, 0
        %v508 = vsel %vm500, %v486, 0
        %v511 = vsel %vm500, %v487, 0
        %v514 = vsel %vm500, %v488, 0
        %v517 = vsel %vm500, %v489, 0
        %v520 = vsel %vm500, %v490, 0
        %v523 = vsel %vm500, %v491, 0
        %v526 = vsel %vm500, %v492, 0
        %v529 = vsel %vm500, %v493, 0
        %v532 = vsel %vm500, %v494, 0
        %v535 = vsel %vm500, %v495, 0
        %v538 = vsel %vm500, %v496, 0
        %v541 = vsel %vm500, %v497, 0
        %v544 = vsel %vm500, %v498, 0
        %v547 = vsel %vm500, %v499, 0
        %549 = vmatprep.subr.mxu0 0.0
        %550 = vmatpush1.msra.mxu0 0.0
        %551 = vmatprep.subr.mxu0 0.0
        %552 = vmatpush1.msra.mxu0 0.0
        %553 = vmatprep.subr.mxu0 0.0
        %554 = vmatpush1.msra.mxu0 0.0
        %555 = vmatprep.subr.mxu0 0.0
        %556 = vmatpush1.msra.mxu0 0.0
        %557 = vmatprep.subr.mxu0 0.0
        %558 = vmatpush1.msra.mxu0 0.0
        %559 = vmatprep.subr.mxu0 0.0
        %560 = vmatpush1.msra.mxu0 0.0
        %561 = vmatprep.subr.mxu0 0.0
        %562 = vmatpush1.msra.mxu0 0.0
        %563 = vmatprep.subr.mxu0 0.0
        %564 = vmatpush1.msra.mxu0 0.0
        %565 = vmatprep.subr.mxu0 %v483
        %566 = vmatpush1.msra.mxu0 %v482
        %567 = vmatprep.subr.mxu0 %v481
        %568 = vmatpush1.msra.mxu0 %v480
        %569 = vmatprep.subr.mxu0 %v479
        %570 = vmatpush1.msra.mxu0 %v478
        %571 = vmatprep.subr.mxu0 %v477
        %572 = vmatpush1.msra.mxu0 %v476
        %573 = vmatprep.subr.mxu0 %v467
        %574 = vmatpush1.msra.mxu0 %v466
        %575 = vmatprep.subr.mxu0 %v465
        %576 = vmatpush1.msra.mxu0 %v464
        %577 = vmatprep.subr.mxu0 %v463
        %578 = vmatpush1.msra.mxu0 %v462
        %579 = vmatprep.subr.mxu0 %v461
        %580 = vmatpush1.msra.mxu0 %v460
        %581 = vmatprep.subr.mxu0 0.0
        %582 = vmatpush2.msra.mxu0 0.0
        %583 = vmatprep.subr.mxu0 0.0
        %584 = vmatpush2.msra.mxu0 0.0
        %585 = vmatprep.subr.mxu0 0.0
        %586 = vmatpush2.msra.mxu0 0.0
        %587 = vmatprep.subr.mxu0 0.0
        %588 = vmatpush2.msra.mxu0 0.0
        %589 = vmatprep.subr.mxu0 0.0
        %590 = vmatpush2.msra.mxu0 0.0
        %591 = vmatprep.subr.mxu0 0.0
        %592 = vmatpush2.msra.mxu0 0.0
        %593 = vmatprep.subr.mxu0 0.0
        %594 = vmatpush2.msra.mxu0 0.0
        %595 = vmatprep.subr.mxu0 0.0
        %596 = vmatpush2.msra.mxu0 0.0
        %597 = vmatprep.subr.mxu0 0.0
        %598 = vmatpush2.msra.mxu0 0.0
        %599 = vmatprep.subr.mxu0 0.0
        %600 = vmatpush2.msra.mxu0 0.0
        %601 = vmatprep.subr.mxu0 0.0
        %602 = vmatpush2.msra.mxu0 0.0
        %603 = vmatprep.subr.mxu0 0.0
        %604 = vmatpush2.msra.mxu0 0.0
        %605 = vmatprep.subr.mxu0 0.0
        %606 = vmatpush2.msra.mxu0 0.0
        %607 = vmatprep.subr.mxu0 0.0
        %608 = vmatpush2.msra.mxu0 0.0
        %609 = vmatprep.subr.mxu0 0.0
        %610 = vmatpush2.msra.mxu0 0.0
        %611 = vmatprep.subr.mxu0 0.0
        %612 = vmatpush2.msra.mxu0 0.0
        %613 = vmatprep.mubr.f32.mxu0 0.0
        %614 = vmatmul.mubr.f32.gmra.mxu0 %v502
        %v615 = vpop.f32.mrf.mxu0
        %v616 = vadd.f32 0.0, %v615
        %v617 = vpop.f32.mrf.mxu0
        %v618 = vadd.f32 0.0, %v617
        %619 = vmatprep.mubr.f32.mxu0 0.0
        %620 = vmatmul.mubr.f32.gmra.mxu0 %v505
        %v621 = vpop.f32.mrf.mxu0
        %v622 = vadd.f32 0.0, %v621
        %v623 = vpop.f32.mrf.mxu0
        %v624 = vadd.f32 0.0, %v623
        %625 = vmatprep.mubr.f32.mxu0 0.0
        %626 = vmatmul.mubr.f32.gmra.mxu0 %v508
        %v627 = vpop.f32.mrf.mxu0
        %v628 = vadd.f32 0.0, %v627
        %v629 = vpop.f32.mrf.mxu0
        %v630 = vadd.f32 0.0, %v629
        %631 = vmatprep.mubr.f32.mxu0 0.0
        %632 = vmatmul.mubr.f32.gmra.mxu0 %v511
        %v633 = vpop.f32.mrf.mxu0
        %v634 = vadd.f32 0.0, %v633
        %v635 = vpop.f32.mrf.mxu0
        %v636 = vadd.f32 0.0, %v635
        %637 = vmatprep.mubr.f32.mxu0 0.0
        %638 = vmatmul.mubr.f32.gmra.mxu0 %v514
        %v639 = vpop.f32.mrf.mxu0
        %v640 = vadd.f32 0.0, %v639
        %v641 = vpop.f32.mrf.mxu0
        %v642 = vadd.f32 0.0, %v641
        %643 = vmatprep.mubr.f32.mxu0 0.0
        %644 = vmatmul.mubr.f32.gmra.mxu0 %v517
        %v645 = vpop.f32.mrf.mxu0
        %v646 = vadd.f32 0.0, %v645
        %v647 = vpop.f32.mrf.mxu0
        %v648 = vadd.f32 0.0, %v647
        %649 = vmatprep.mubr.f32.mxu0 0.0
        %650 = vmatmul.mubr.f32.gmra.mxu0 %v520
        %v651 = vpop.f32.mrf.mxu0
        %v652 = vadd.f32 0.0, %v651
        %v653 = vpop.f32.mrf.mxu0
        %v654 = vadd.f32 0.0, %v653
        %655 = vmatprep.mubr.f32.mxu0 0.0
        %656 = vmatmul.mubr.f32.gmra.mxu0 %v523
        %v657 = vpop.f32.mrf.mxu0
        %v658 = vadd.f32 0.0, %v657
        %v659 = vpop.f32.mrf.mxu0
        %v660 = vadd.f32 0.0, %v659
        %661 = vmatprep.mubr.f32.mxu0 0.0
        %662 = vmatmul.mubr.f32.gmra.mxu0 %v526
        %v663 = vpop.f32.mrf.mxu0
        %v664 = vadd.f32 0.0, %v663
        %v665 = vpop.f32.mrf.mxu0
        %v666 = vadd.f32 0.0, %v665
        %667 = vmatprep.mubr.f32.mxu0 0.0
        %668 = vmatmul.mubr.f32.gmra.mxu0 %v529
        %v669 = vpop.f32.mrf.mxu0
        %v670 = vadd.f32 0.0, %v669
        %v671 = vpop.f32.mrf.mxu0
        %v672 = vadd.f32 0.0, %v671
        %673 = vmatprep.mubr.f32.mxu0 0.0
        %674 = vmatmul.mubr.f32.gmra.mxu0 %v532
        %v675 = vpop.f32.mrf.mxu0
        %v676 = vadd.f32 0.0, %v675
        %v677 = vpop.f32.mrf.mxu0
        %v678 = vadd.f32 0.0, %v677
        %679 = vmatprep.mubr.f32.mxu0 0.0
        %680 = vmatmul.mubr.f32.gmra.mxu0 %v535
        %v681 = vpop.f32.mrf.mxu0
        %v682 = vadd.f32 0.0, %v681
        %v683 = vpop.f32.mrf.mxu0
        %v684 = vadd.f32 0.0, %v683
        %685 = vmatprep.mubr.f32.mxu0 0.0
        %686 = vmatmul.mubr.f32.gmra.mxu0 %v538
        %v687 = vpop.f32.mrf.mxu0
        %v688 = vadd.f32 0.0, %v687
        %v689 = vpop.f32.mrf.mxu0
        %v690 = vadd.f32 0.0, %v689
        %691 = vmatprep.mubr.f32.mxu0 0.0
        %692 = vmatmul.mubr.f32.gmra.mxu0 %v541
        %v693 = vpop.f32.mrf.mxu0
        %v694 = vadd.f32 0.0, %v693
        %v695 = vpop.f32.mrf.mxu0
        %v696 = vadd.f32 0.0, %v695
        %697 = vmatprep.mubr.f32.mxu0 0.0
        %698 = vmatmul.mubr.f32.gmra.mxu0 %v544
        %v699 = vpop.f32.mrf.mxu0
        %v700 = vadd.f32 0.0, %v699
        %v701 = vpop.f32.mrf.mxu0
        %v702 = vadd.f32 0.0, %v701
        %703 = vmatprep.mubr.f32.mxu0 0.0
        %704 = vmatmul.mubr.f32.gmra.mxu0 %v547
        %v705 = vpop.f32.mrf.mxu0
        %v706 = vadd.f32 0.0, %v705
        %v707 = vpop.f32.mrf.mxu0
        %v708 = vadd.f32 0.0, %v707
        %709 = vdwg.mxu0
        %v710 = vld [vmem:[%s4] sm:$0xff]
        %v711 = vld [vmem:[%s4 + $0x8] sm:$0xff]
        %v712 = vld [vmem:[%s4 + $0x10] sm:$0xff]
        %v713 = vld [vmem:[%s4 + $0x18] sm:$0xff]
        %715 = vset.pattern.permute.xlu0 0
        %716 = vperm.xlu0 %715, %v710
        %v717 = vpop.permute.xlu0 %716
        %720 = vset.pattern.permute.xlu0 0
        %721 = vperm.xlu0 %720, %v711
        %v722 = vpop.permute.xlu0 %721
        %725 = vset.pattern.permute.xlu0 0
        %726 = vperm.xlu0 %725, %v712
        %v727 = vpop.permute.xlu0 %726
        %730 = vset.pattern.permute.xlu0 0
        %731 = vperm.xlu0 %730, %v713
        %v732 = vpop.permute.xlu0 %731
        %v734 = vadd.f32 %v616, %v717
        %v735 = vadd.f32 %v618, %v717
        %v736 = vadd.f32 %v622, %v722
        %v737 = vadd.f32 %v624, %v722
        %v738 = vadd.f32 %v628, %v727
        %v739 = vadd.f32 %v630, %v727
        %v740 = vadd.f32 %v634, %v732
        %v741 = vadd.f32 %v636, %v732
        %v742 = vtanh.pop %v734
        %v743 = vtanh.pop %v735
        %v744 = vtanh.pop %v736
        %v745 = vtanh.pop %v737
        %v746 = vtanh.pop %v738
        %v747 = vtanh.pop %v739
        %v748 = vtanh.pop %v740
        %v749 = vtanh.pop %v741
        %v750 = vmul.f32 %v742, %v742
        %v751 = vmul.f32 %v743, %v743
        %v752 = vmul.f32 %v744, %v744
        %v753 = vmul.f32 %v745, %v745
        %v754 = vmul.f32 %v746, %v746
        %v755 = vmul.f32 %v747, %v747
        %v756 = vmul.f32 %v748, %v748
        %v757 = vmul.f32 %v749, %v749
        %v758 = vsub.f32 1.0, %v750
        %v759 = vsub.f32 1.0, %v751
        %v760 = vsub.f32 1.0, %v752
        %v761 = vsub.f32 1.0, %v753
        %v762 = vsub.f32 1.0, %v754
        %v763 = vsub.f32 1.0, %v755
        %v764 = vsub.f32 1.0, %v756
        %v765 = vsub.f32 1.0, %v757
        %v766 = vmul.f32 %v758, %v640
        %v767 = vmul.f32 %v759, %v642
        %v768 = vmul.f32 %v760, %v646
        %v769 = vmul.f32 %v761, %v648
        %v770 = vmul.f32 %v762, %v652
        %v771 = vmul.f32 %v763, %v654
        %v772 = vmul.f32 %v764, %v658
        %v773 = vmul.f32 %v765, %v660
        %v774 = vmul.f32 %v758, %v664
        %v775 = vmul.f32 %v759, %v666
        %v776 = vmul.f32 %v760, %v670
        %v777 = vmul.f32 %v761, %v672
        %v778 = vmul.f32 %v762, %v676
        %v779 = vmul.f32 %v763, %v678
        %v780 = vmul.f32 %v764, %v682
        %v781 = vmul.f32 %v765, %v684
        %v782 = vmul.f32 %v758, %v688
        %v783 = vmul.f32 %v759, %v690
        %v784 = vmul.f32 %v760, %v694
        %v785 = vmul.f32 %v761, %v696
        %v786 = vmul.f32 %v762, %v700
        %v787 = vmul.f32 %v763, %v702
        %v788 = vmul.f32 %v764, %v706
        %v789 = vmul.f32 %v765, %v708
        %v790 = vld [vmem:[%s5] sm:$0xff]
        %v791 = vld [vmem:[%s5 + $0x8] sm:$0xff]
        %v792 = vld [vmem:[%s5 + $0x10] sm:$0xff]
        %v793 = vld [vmem:[%s5 + $0x18] sm:$0xff]
        %v794 = vld [vmem:[%s6] sm:$0xff]
        %v795 = vld [vmem:[%s6 + $0x8] sm:$0xff]
        %v796 = vld [vmem:[%s6 + $0x10] sm:$0xff]
        %v797 = vld [vmem:[%s6 + $0x18] sm:$0xff]
        %799 = vset.pattern.permute.xlu0 0
        %800 = vperm.xlu0 %799, %v794
        %v801 = vpop.permute.xlu0 %800
        %804 = vset.pattern.permute.xlu0 0
        %805 = vperm.xlu0 %804, %v795
        %v806 = vpop.permute.xlu0 %805
        %809 = vset.pattern.permute.xlu0 0
        %810 = vperm.xlu0 %809, %v796
        %v811 = vpop.permute.xlu0 %810
        %814 = vset.pattern.permute.xlu0 0
        %815 = vperm.xlu0 %814, %v797
        %v816 = vpop.permute.xlu0 %815
        %818 = vmatprep.subr.mxu0 %v789
        %819 = vmatpush1.msra.mxu0 %v788
        %820 = vmatprep.subr.mxu0 %v787
        %821 = vmatpush1.msra.mxu0 %v786
        %822 = vmatprep.subr.mxu0 %v785
        %823 = vmatpush1.msra.mxu0 %v784
        %824 = vmatprep.subr.mxu0 %v783
        %825 = vmatpush1.msra.mxu0 %v782
        %826 = vmatprep.subr.mxu0 %v781
        %827 = vmatpush1.msra.mxu0 %v780
        %828 = vmatprep.subr.mxu0 %v779
        %829 = vmatpush1.msra.mxu0 %v778
        %830 = vmatprep.subr.mxu0 %v777
        %831 = vmatpush1.msra.mxu0 %v776
        %832 = vmatprep.subr.mxu0 %v775
        %833 = vmatpush1.msra.mxu0 %v774
        %834 = vmatprep.subr.mxu0 %v773
        %835 = vmatpush1.msra.mxu0 %v772
        %836 = vmatprep.subr.mxu0 %v771
        %837 = vmatpush1.msra.mxu0 %v770
        %838 = vmatprep.subr.mxu0 %v769
        %839 = vmatpush1.msra.mxu0 %v768
        %840 = vmatprep.subr.mxu0 %v767
        %841 = vmatpush1.msra.mxu0 %v766
        %842 = vmatprep.subr.mxu0 %v749
        %843 = vmatpush1.msra.mxu0 %v748
        %844 = vmatprep.subr.mxu0 %v747
        %845 = vmatpush1.msra.mxu0 %v746
        %846 = vmatprep.subr.mxu0 %v745
        %847 = vmatpush1.msra.mxu0 %v744
        %848 = vmatprep.subr.mxu0 %v743
        %849 = vmatpush1.msra.mxu0 %v742
        %850 = vmatprep.subr.mxu0 0.0
        %851 = vmatpush2.msra.mxu0 0.0
        %852 = vmatprep.subr.mxu0 0.0
        %853 = vmatpush2.msra.mxu0 0.0
        %854 = vmatprep.subr.mxu0 0.0
        %855 = vmatpush2.msra.mxu0 0.0
        %856 = vmatprep.subr.mxu0 0.0
        %857 = vmatpush2.msra.mxu0 0.0
        %858 = vmatprep.subr.mxu0 0.0
        %859 = vmatpush2.msra.mxu0 0.0
        %860 = vmatprep.subr.mxu0 0.0
        %861 = vmatpush2.msra.mxu0 0.0
        %862 = vmatprep.subr.mxu0 0.0
        %863 = vmatpush2.msra.mxu0 0.0
        %864 = vmatprep.subr.mxu0 0.0
        %865 = vmatpush2.msra.mxu0 0.0
        %866 = vmatprep.subr.mxu0 0.0
        %867 = vmatpush2.msra.mxu0 0.0
        %868 = vmatprep.subr.mxu0 0.0
        %869 = vmatpush2.msra.mxu0 0.0
        %870 = vmatprep.subr.mxu0 0.0
        %871 = vmatpush2.msra.mxu0 0.0
        %872 = vmatprep.subr.mxu0 0.0
        %873 = vmatpush2.msra.mxu0 0.0
        %874 = vmatprep.subr.mxu0 0.0
        %875 = vmatpush2.msra.mxu0 0.0
        %876 = vmatprep.subr.mxu0 0.0
        %877 = vmatpush2.msra.mxu0 0.0
        %878 = vmatprep.subr.mxu0 0.0
        %879 = vmatpush2.msra.mxu0 0.0
        %880 = vmatprep.subr.mxu0 0.0
        %881 = vmatpush2.msra.mxu0 0.0
        %882 = vmatprep.mubr.f32.mxu0 0.0
        %883 = vmatmul.mubr.f32.gmra.mxu0 %v790
        %v884 = vpop.f32.mrf.mxu0
        %v885 = vadd.f32 %v801, %v884
        %v886 = vpop.f32.mrf.mxu0
        %v887 = vadd.f32 %v801, %v886
        %888 = vmatprep.mubr.f32.mxu0 0.0
        %889 = vmatmul.mubr.f32.gmra.mxu0 %v791
        %v890 = vpop.f32.mrf.mxu0
        %v891 = vadd.f32 %v806, %v890
        %v892 = vpop.f32.mrf.mxu0
        %v893 = vadd.f32 %v806, %v892
        %894 = vmatprep.mubr.f32.mxu0 0.0
        %895 = vmatmul.mubr.f32.gmra.mxu0 %v792
        %v896 = vpop.f32.mrf.mxu0
        %v897 = vadd.f32 %v811, %v896
        %v898 = vpop.f32.mrf.mxu0
        %v899 = vadd.f32 %v811, %v898
        %900 = vmatprep.mubr.f32.mxu0 0.0
        %901 = vmatmul.mubr.f32.gmra.mxu0 %v793
        %v902 = vpop.f32.mrf.mxu0
        %v903 = vadd.f32 %v816, %v902
        %v904 = vpop.f32.mrf.mxu0
        %v905 = vadd.f32 %v816, %v904
        %906 = vdwg.mxu0
        %907 = vst [vmem:[%s268] sm:$0xff] %v885
        %908 = vst [vmem:[%s268 + $0x8] sm:$0xff] %v887
        %909 = vst [vmem:[%s268 + $0x10] sm:$0xff] %v891
        %910 = vst [vmem:[%s268 + $0x18] sm:$0xff] %v893
        %911 = vst [vmem:[%s268 + $0x20] sm:$0xff] %v897
        %912 = vst [vmem:[%s268 + $0x28] sm:$0xff] %v899
        %913 = vst [vmem:[%s268 + $0x30] sm:$0xff] %v903
        %914 = vst [vmem:[%s268 + $0x38] sm:$0xff] %v905
        %s915 = sand.u32 %s178, 1
        %s916 = sand.u32 %s178, 1
        %s917 = smul.addr %s916, 64
        %s918 = scalar_lea.vmem [#allocation2], %s917
        // Predicated region
        $region49: #{derivnet3d_2layer.1} parent=47 // pred_check
          %p919 = pneg %p188
        $region50: #{derivnet3d_2layer.1} parent=47 // pred_check_branch
          %921 = sbr.rel (%p919) target = $region52
        $region51: #{derivnet3d_2layer.1} parent=47 // pred_region
          %s922 = smul.u32 2, %s18
          %s923 = smul.addr %s922, 8
          %s924 = scalar_lea.vmem %s7, %s923
          // Predicated region
          $region53: #{derivnet3d_2layer.1} parent=51 // pred_check
            _
          $region54: #{derivnet3d_2layer.1} parent=51 // pred_check_branch
            %926 = sbr.rel (0) target = $region56
          $region55: #{derivnet3d_2layer.1} parent=51 // pred_region
            // Predicated region
            $region57: #{derivnet3d_2layer.1} parent=55 // pred_check
              _
            $region58: #{derivnet3d_2layer.1} parent=55 // pred_check_branch
              %928 = sbr.rel (0) target = $region60
            $region59: #{derivnet3d_2layer.1} parent=55 // pred_region
              loop: start=0, step=1, limit=1
              $region61: #{derivnet3d_2layer.1} parent=59 // loop_pre_header
                _
              $region62: #{derivnet3d_2layer.1} parent=59 // loop_header
                %s930 = sphi 0, %s934
                %p931 = scmp.ge.s32.totalorder %s930, 1
                %s935 = sphi %s918, %s918
                %s936 = sphi %s924, %s924
              $region63: #{derivnet3d_2layer.1} parent=59 // loop_header_branch
                %933 = sbr.rel (%p931) target = $region67
              $region64: #{derivnet3d_2layer.1} parent=59 // loop_body
                %v937 = vld [vmem:[%s935] sm:$0xff]
                %938 = vst [vmem:[%s936] sm:$0xff] %v937
                %v939 = vld [vmem:[%s935 + $0x8] sm:$0xff]
                %940 = vst [vmem:[%s936 + $0x8] sm:$0xff] %v939
                %v941 = vld [vmem:[%s935 + $0x10] sm:$0xff]
                %942 = vst [vmem:[%s936 + $0x20] sm:$0xff] %v941
                %v943 = vld [vmem:[%s935 + $0x18] sm:$0xff]
                %944 = vst [vmem:[%s936 + $0x28] sm:$0xff] %v943
                %v945 = vld [vmem:[%s935 + $0x20] sm:$0xff]
                %946 = vst [vmem:[%s936 + $0x40] sm:$0xff] %v945
                %v947 = vld [vmem:[%s935 + $0x28] sm:$0xff]
                %948 = vst [vmem:[%s936 + $0x48] sm:$0xff] %v947
                %v949 = vld [vmem:[%s935 + $0x30] sm:$0xff]
                %950 = vst [vmem:[%s936 + $0x60] sm:$0xff] %v949
                %v951 = vld [vmem:[%s935 + $0x38] sm:$0xff]
                %952 = vst [vmem:[%s936 + $0x68] sm:$0xff] %v951
              $region65: #{derivnet3d_2layer.1} parent=59 // loop_footer
                %s934 = sadd.s32 1, %s930
              $region66: #{derivnet3d_2layer.1} parent=59 // loop_footer_branch
                %929 = sbr.rel target = $region62
              $region67: #{derivnet3d_2layer.1} parent=59 // loop_exit
                _
            $region60: #{derivnet3d_2layer.1} parent=55 // pred_fallthru
              _
            // Predicated region
            $region68: #{derivnet3d_2layer.1} parent=55 // pred_check
              _
            $region69: #{derivnet3d_2layer.1} parent=55 // pred_check_branch
              %954 = sbr.rel target = $region71
            $region70: #{derivnet3d_2layer.1} parent=55 // pred_region
              _
            $region71: #{derivnet3d_2layer.1} parent=55 // pred_fallthru
              _
          $region56: #{derivnet3d_2layer.1} parent=51 // pred_fallthru
            _
          %955 = vnop
        $region52: #{derivnet3d_2layer.1} parent=47 // pred_fallthru
          _
      $region48: #{derivnet3d_2layer.1} parent=5 // pred_fallthru
        _
      %p956 = scmp.le.s32.totalorder 2, %s13
      // Predicated region
      $region72: #{derivnet3d_2layer.1} parent=5 // pred_check
        %p957 = pneg %p956
      $region73: #{derivnet3d_2layer.1} parent=5 // pred_check_branch
        %959 = sbr.rel (%p957) target = $region75
      $region74: #{derivnet3d_2layer.1} parent=5 // pred_region
        %s960 = ssub.s32 %s13, 2
        // Predicated region
        $region76: #{derivnet3d_2layer.1} parent=74 // pred_check
          %p961 = pneg %p194
        $region77: #{derivnet3d_2layer.1} parent=74 // pred_check_branch
          %963 = sbr.rel (%p961) target = $region79
        $region78: #{derivnet3d_2layer.1} parent=74 // pred_region
          %s964 = sand.u32 %s179, 1
          %s965 = sand.u32 %s179, 1
          %s966 = smul.addr %s965, 64
          %s967 = scalar_lea.vmem [#allocation2], %s966
        $region79: #{derivnet3d_2layer.1} parent=74 // pred_fallthru
          _
      $region75: #{derivnet3d_2layer.1} parent=5 // pred_fallthru
        _
    $region6: #{derivnet3d_2layer.1} parent=1 // loop_footer
      %s17 = sadd.s32 1, %s13
    $region7: #{derivnet3d_2layer.1} parent=1 // loop_footer_branch
      %12 = sbr.rel target = $region3
    $region8: #{derivnet3d_2layer.1} parent=1 // loop_exit
      _

</llo_original>
